<compile_context>
chip_gen: v7x
topology: tpu7x:2x2x1
jax: 0.10.0
libtpu: 0.0.40
codegen_flags: <defaults>
</compile_context>

<pallas_src>
import math

import jax
import jax.numpy as jnp
from jax.experimental import pallas as pl
from jax.experimental.pallas import tpu as pltpu

# Constants from the PyTorch module's registered buffers.
_SHIFT3 = jnp.asarray([0.48145466, 0.4578275, 0.40821073], dtype=jnp.float32)
_SCALE3 = jnp.asarray([0.26862954, 0.26130258, 0.27577711], dtype=jnp.float32)


def _scaling_kernel(x_ref, mask_ref, a_ref, b_ref, o_ref):
    # x_ref:    (TM, D)
    # mask_ref: (TM, 1)
    # a_ref:    (1, D)   a = 1 / (255 * scale)
    # b_ref:    (1, D)   b = shift / scale
    x = x_ref[...]
    a = a_ref[...]
    b = b_ref[...]
    m = mask_ref[...]
    # ((inp + 1.0) * 127.5).clamp(0, 255)
    y = jnp.clip((x + 1.0) * 127.5, 0.0, 255.0)
    # (y/255 - shift)/scale  ==  y*a - b      (divide pre-fused in wrapper)
    # then * pad_mask
    o_ref[...] = (y * a - b) * m


def _pick_tm(M: int, D: int, dtype) -> int:
    """Rows per block: ~2 MiB tiles, sublane-aligned (multiple of 8)."""
    itemsize = jnp.dtype(dtype).itemsize
    target_bytes = 2 * 1024 * 1024
    tm = max(1, target_bytes // (D * itemsize))
    tm = min(tm, M)
    if tm >= 8:
        tm = (tm // 8) * 8          # sublane-aligned
    else:
        tm = min(8, M)              # 8 (aligned) or the whole axis (== full dim)
    return int(tm)


def scaling_layer_for_beit2(inp: jax.Array, pad_mask: jax.Array) -> jax.Array:
    """Pallas equivalent of ScalingLayerForBeit2.forward.

    inp:      (B, N, patch_size**2 * 3) float32
    pad_mask: (B, N) float32 (or castable)
    returns:  (B, N, patch_size**2 * 3) float32
    """
    B, N, D = inp.shape
    patch_size = int(round(math.sqrt(D / 3)))
    assert patch_size * patch_size * 3 == D, "last dim must be p*p*3"

    dtype = inp.dtype

    # Tile the length-3 shift/scale across the flattened (p*p*3) last dim and
    # pre-fuse the divide into a multiply-add.
    shift_full = jnp.tile(_SHIFT3, patch_size * patch_size)
    scale_full = jnp.tile(_SCALE3, patch_size * patch_size)
    a_full = (1.0 / (255.0 * scale_full)).astype(dtype).reshape(1, D)
    b_full = (shift_full / scale_full).astype(dtype).reshape(1, D)

    # Lane-dense 2-D view: rows = tokens, last dim = D.
    M = B * N
    x2 = inp.reshape(M, D)
    mask2 = pad_mask.astype(dtype).reshape(M, 1)

    TM = _pick_tm(M, D, dtype)
    grid = (pl.cdiv(M, TM),)

    out2 = pl.pallas_call(
        _scaling_kernel,
        out_shape=jax.ShapeDtypeStruct((M, D), dtype),
        grid_spec=pltpu.PrefetchScalarGridSpec(
            num_scalar_prefetch=0,
            grid=grid,
            in_specs=[
                pl.BlockSpec((TM, D), lambda m: (m, 0)),
                pl.BlockSpec((TM, 1), lambda m: (m, 0)),
                pl.BlockSpec((1, D), lambda m: (0, 0)),   # resident constant
                pl.BlockSpec((1, D), lambda m: (0, 0)),   # resident constant
            ],
            out_specs=pl.BlockSpec((TM, D), lambda m: (m, 0)),
        ),
        compiler_params=pltpu.CompilerParams(
            dimension_semantics=("parallel",),
        ),
    )(x2, mask2, a_full, b_full)

    return out2.reshape(B, N, D)


def _reference(inp, pad_mask):
    B, N, D = inp.shape
    p = int(round(math.sqrt(D / 3)))
    x = inp.reshape(B, N, p, p, 3)
    x = jnp.clip((x + 1.0) * 127.5, 0.0, 255.0) / 255.0
    x = (x - _SHIFT3.reshape(1, 1, 1, 1, 3)) / _SCALE3.reshape(1, 1, 1, 1, 3)
    x = x.reshape(B, N, D)
    return x * pad_mask.astype(inp.dtype)[:, :, None]


def _run_case(key, B, N, patch_size):
    D = patch_size * patch_size * 3
    k1, k2 = jax.random.split(key)
    inp = jax.random.uniform(k1, (B, N, D), dtype=jnp.float32,
                             minval=-1.5, maxval=1.5)
    pad_mask = (jax.random.uniform(k2, (B, N)) > 0.3).astype(jnp.float32)

    out = scaling_layer_for_beit2(inp, pad_mask)
    out = jax.block_until_ready(out)

    ref = _reference(inp, pad_mask)
    assert out.shape == (B, N, D)
    assert jnp.allclose(out, ref, atol=1e-5, rtol=1e-5)


if __name__ == "__main__":
    key = jax.random.PRNGKey(0)
    ka, kb = jax.random.split(key)

    # Production-like (lane-dense) shape: patch_size=16 -> D=768 (6 x 128).
    _run_case(ka, B=2, N=64, patch_size=16)
    # Small / non-128-aligned D sanity case (matches the original test shape).
    _run_case(kb, B=2, N=8, patch_size=4)

    print("KERNEL_OK")
</pallas_src>

<mosaic_0001>
module attributes {stable_mosaic.version = 11 : i64} {
  func.func @_scaling_kernel(%arg0: i32, %arg1: memref<128x768xf32, #tpu.memory_space<vmem>>, %arg2: memref<128x1xf32, #tpu.memory_space<vmem>>, %arg3: memref<1x768xf32, #tpu.memory_space<vmem>>, %arg4: memref<1x768xf32, #tpu.memory_space<vmem>>, %arg5: memref<128x768xf32, #tpu.memory_space<vmem>>) attributes {dimension_semantics = [#tpu.dimension_semantics<parallel>], iteration_bounds = array<i64: 1>, scalar_prefetch = 0 : i64, scratch_operands = 0 : i64, tpu.core_type = #tpu.core_type<tc>, window_params = [{transform_indices = @transform_0, window_bounds = array<i64: 128, 768>}, {transform_indices = @transform_1, window_bounds = array<i64: 128, 1>}, {pipeline_mode = #tpu.pipeline_mode<synchronous>, transform_indices = @transform_2, window_bounds = array<i64: 1, 768>}, {pipeline_mode = #tpu.pipeline_mode<synchronous>, transform_indices = @transform_3, window_bounds = array<i64: 1, 768>}, {transform_indices = @transform_4, window_bounds = array<i64: 128, 768>}]} {
    %c0 = arith.constant 0 : index
    %c0_0 = arith.constant 0 : index
    %0 = vector.load %arg1[%c0, %c0_0] : memref<128x768xf32, #tpu.memory_space<vmem>>, vector<128x768xf32>
    %c0_1 = arith.constant 0 : index
    %c0_2 = arith.constant 0 : index
    %1 = vector.load %arg3[%c0_1, %c0_2] : memref<1x768xf32, #tpu.memory_space<vmem>>, vector<1x768xf32>
    %c0_3 = arith.constant 0 : index
    %c0_4 = arith.constant 0 : index
    %2 = vector.load %arg4[%c0_3, %c0_4] : memref<1x768xf32, #tpu.memory_space<vmem>>, vector<1x768xf32>
    %c0_5 = arith.constant 0 : index
    %c0_6 = arith.constant 0 : index
    %3 = vector.load %arg2[%c0_5, %c0_6] : memref<128x1xf32, #tpu.memory_space<vmem>>, vector<128x1xf32>
    %cst = arith.constant 1.000000e+00 : f32
    %4 = vector.broadcast %cst : f32 to vector<128x768xf32>
    %5 = arith.addf %0, %4 : vector<128x768xf32>
    %cst_7 = arith.constant 1.275000e+02 : f32
    %6 = vector.broadcast %cst_7 : f32 to vector<128x768xf32>
    %7 = arith.mulf %5, %6 : vector<128x768xf32>
    %cst_8 = arith.constant 0.000000e+00 : f32
    %cst_9 = arith.constant 2.550000e+02 : f32
    %8 = vector.broadcast %cst_8 : f32 to vector<128x768xf32>
    %9 = arith.maximumf %8, %7 : vector<128x768xf32>
    %10 = vector.broadcast %cst_9 : f32 to vector<128x768xf32>
    %11 = arith.minimumf %10, %9 : vector<128x768xf32>
    %12 = vector.broadcast %1 : vector<1x768xf32> to vector<128x768xf32>
    %13 = arith.mulf %11, %12 : vector<128x768xf32>
    %14 = vector.broadcast %2 : vector<1x768xf32> to vector<128x768xf32>
    %15 = arith.subf %13, %14 : vector<128x768xf32>
    %16 = vector.broadcast %3 : vector<128x1xf32> to vector<128x768xf32>
    %17 = arith.mulf %15, %16 : vector<128x768xf32>
    %c0_10 = arith.constant 0 : index
    %c0_11 = arith.constant 0 : index
    %18 = vector.load %arg5[%c0_10, %c0_11] : memref<128x768xf32, #tpu.memory_space<vmem>>, vector<128x768xf32>
    tpu.vector_store %arg5[%c0_10, %c0_11], %17 {strides = array<i32>} : memref<128x768xf32, #tpu.memory_space<vmem>>, vector<128x768xf32>,
    return
  }
  func.func @transform_0(%arg0: i32) -> (i32, i32) {
    %c0_i32 = arith.constant 0 : i32
    %c0_i32_0 = arith.constant 0 : i32
    return %arg0, %c0_i32 : i32, i32
  }
  func.func @transform_1(%arg0: i32) -> (i32, i32) {
    %c0_i32 = arith.constant 0 : i32
    %c0_i32_0 = arith.constant 0 : i32
    return %arg0, %c0_i32 : i32, i32
  }
  func.func @transform_2(%arg0: i32) -> (i32, i32) {
    %c0_i32 = arith.constant 0 : i32
    %c0_i32_0 = arith.constant 0 : i32
    %c0_i32_1 = arith.constant 0 : i32
    return %c0_i32, %c0_i32_0 : i32, i32
  }
  func.func @transform_3(%arg0: i32) -> (i32, i32) {
    %c0_i32 = arith.constant 0 : i32
    %c0_i32_0 = arith.constant 0 : i32
    %c0_i32_1 = arith.constant 0 : i32
    return %c0_i32, %c0_i32_0 : i32, i32
  }
  func.func @transform_4(%arg0: i32) -> (i32, i32) {
    %c0_i32 = arith.constant 0 : i32
    %c0_i32_0 = arith.constant 0 : i32
    return %arg0, %c0_i32 : i32, i32
  }
}

</mosaic_0001>

<llo_original>
// kernel: tpu_custom_call.1
$region0: #{tpu_custom_call.1}
  #allocation0 [shape = 'u32[]', space=smem, size = 0x4, offset = 0x4, fixed_abs, tag = 'smem constant byte address 0x4 - core index']
  #allocation1 [shape = 'u32[144,128]{1,0:T(1,128)}', space=vmem, size = 0x12000, scoped, tag = 'internal scratch']
  %s0 = inlined_call_operand.hbm [shape: f32[128,768], index: 0, kind: input, shape index: {}]
  %s1 = inlined_call_operand.vmem [shape: f32[128,1], index: 1, kind: input, shape index: {}]
  %s2 = inlined_call_operand.vmem [shape: f32[1,768], index: 2, kind: input, shape index: {}]
  %s3 = inlined_call_operand.vmem [shape: f32[1,768], index: 3, kind: input, shape index: {}]
  %s4 = inlined_call_operand.hbm [shape: f32[128,768], index: 4, kind: output, shape index: {}]
  %s5 = sld [smem:[#allocation0]]
  $region30: #{tpu_custom_call.1} parent=0
    _
  %s7 = ssub.s32 1, %s5
  %s8 = scalar_select 0, %s7, %s5
  $region1: #{tpu_custom_call.1} parent=0
    #allocation2 [shape = 'u8[393216]{0}', space=vmem, size = 0x60000, scoped, tag = 'input window, operand 0, single buffered']
    #allocation3 [shape = 's32[1]{0}', space=sflag, size = 0x4, scoped, tag = 'scoped memory for tpu_custom_call.1']
    #allocation4 [shape = 's32[1]{0}', space=sflag, size = 0x4, scoped, tag = 'scoped memory for tpu_custom_call.1']
    #allocation5 [shape = 'u8[393216]{0}', space=vmem, size = 0x60000, scoped, tag = 'output window, operand 0, single buffered']
    %9 = vsyncpa [#allocation3], 0
    %10 = vsyncpa [#allocation4], 0
    // Predicated region
    $region2: #{tpu_custom_call.1} parent=1 // pred_check
      _
    $region3: #{tpu_custom_call.1} parent=1 // pred_check_branch
      %12 = sbr.rel (0) target = $region5
    $region4: #{tpu_custom_call.1} parent=1 // pred_region
      %s14 = ssub.s32 12288, 12288
      %15 = vsyncadd [#allocation3], %s14
      %s16 = sshll.u32 [#allocation2], 4
      %s17 = int_to_ptr.vmem [resolvable:$true] %s16
      %22 = dma.hbm_to_vmem [thread:$0]  %s0, 12288, %s17, [#allocation3], 768, 768, 48
    $region5: #{tpu_custom_call.1} parent=1 // pred_fallthru
      _
    // Predicated region
    $region6: #{tpu_custom_call.1} parent=1 // pred_check
      _
    $region7: #{tpu_custom_call.1} parent=1 // pred_check_branch
      %24 = sbr.rel (0) target = $region9
    $region8: #{tpu_custom_call.1} parent=1 // pred_region
      _
    $region9: #{tpu_custom_call.1} parent=1 // pred_fallthru
      _
    // Predicated region
    $region10: #{tpu_custom_call.1} parent=1 // pred_check
      _
    $region11: #{tpu_custom_call.1} parent=1 // pred_check_branch
      %26 = sbr.rel (0) target = $region13
    $region12: #{tpu_custom_call.1} parent=1 // pred_region
      _
    $region13: #{tpu_custom_call.1} parent=1 // pred_fallthru
      _
    // Predicated region
    $region14: #{tpu_custom_call.1} parent=1 // pred_check
      _
    $region15: #{tpu_custom_call.1} parent=1 // pred_check_branch
      %28 = sbr.rel (0) target = $region17
    $region16: #{tpu_custom_call.1} parent=1 // pred_region
      _
    $region17: #{tpu_custom_call.1} parent=1 // pred_fallthru
      _
    // Predicated region
    $region18: #{tpu_custom_call.1} parent=1 // pred_check
      _
    $region19: #{tpu_custom_call.1} parent=1 // pred_check_branch
      %30 = sbr.rel (0) target = $region21
    $region20: #{tpu_custom_call.1} parent=1 // pred_region
      %31 = dma.done [#allocation3], 12288
    $region21: #{tpu_custom_call.1} parent=1 // pred_fallthru
      _
    %v32 = vld [vmem:[#allocation2] sm:$0xff]
    %v33 = vld [vmem:[#allocation2 + $0x8] sm:$0xff]
    %v34 = vld [vmem:[#allocation2 + $0x10] sm:$0xff]
    %v35 = vld [vmem:[#allocation2 + $0x18] sm:$0xff]
    %v36 = vld [vmem:[#allocation2 + $0x20] sm:$0xff]
    %v37 = vld [vmem:[#allocation2 + $0x28] sm:$0xff]
    %v38 = vld [vmem:[#allocation2 + $0x30] sm:$0xff]
    %v39 = vld [vmem:[#allocation2 + $0x38] sm:$0xff]
    %v40 = vld [vmem:[#allocation2 + $0x40] sm:$0xff]
    %v41 = vld [vmem:[#allocation2 + $0x48] sm:$0xff]
    %v42 = vld [vmem:[#allocation2 + $0x50] sm:$0xff]
    %v43 = vld [vmem:[#allocation2 + $0x58] sm:$0xff]
    %v44 = vld [vmem:[#allocation2 + $0x60] sm:$0xff]
    %v45 = vld [vmem:[#allocation2 + $0x68] sm:$0xff]
    %v46 = vld [vmem:[#allocation2 + $0x70] sm:$0xff]
    %v47 = vld [vmem:[#allocation2 + $0x78] sm:$0xff]
    %v48 = vld [vmem:[#allocation2 + $0x80] sm:$0xff]
    %v49 = vld [vmem:[#allocation2 + $0x88] sm:$0xff]
    %v50 = vld [vmem:[#allocation2 + $0x90] sm:$0xff]
    %v51 = vld [vmem:[#allocation2 + $0x98] sm:$0xff]
    %v52 = vld [vmem:[#allocation2 + $0xa0] sm:$0xff]
    %v53 = vld [vmem:[#allocation2 + $0xa8] sm:$0xff]
    %v54 = vld [vmem:[#allocation2 + $0xb0] sm:$0xff]
    %v55 = vld [vmem:[#allocation2 + $0xb8] sm:$0xff]
    %v56 = vld [vmem:[#allocation2 + $0xc0] sm:$0xff]
    %v57 = vld [vmem:[#allocation2 + $0xc8] sm:$0xff]
    %v58 = vld [vmem:[#allocation2 + $0xd0] sm:$0xff]
    %v59 = vld [vmem:[#allocation2 + $0xd8] sm:$0xff]
    %v60 = vld [vmem:[#allocation2 + $0xe0] sm:$0xff]
    %v61 = vld [vmem:[#allocation2 + $0xe8] sm:$0xff]
    %v62 = vld [vmem:[#allocation2 + $0xf0] sm:$0xff]
    %v63 = vld [vmem:[#allocation2 + $0xf8] sm:$0xff]
    %v64 = vld [vmem:[#allocation2 + $0x100] sm:$0xff]
    %v65 = vld [vmem:[#allocation2 + $0x108] sm:$0xff]
    %v66 = vld [vmem:[#allocation2 + $0x110] sm:$0xff]
    %v67 = vld [vmem:[#allocation2 + $0x118] sm:$0xff]
    %v68 = vld [vmem:[#allocation2 + $0x120] sm:$0xff]
    %v69 = vld [vmem:[#allocation2 + $0x128] sm:$0xff]
    %v70 = vld [vmem:[#allocation2 + $0x130] sm:$0xff]
    %v71 = vld [vmem:[#allocation2 + $0x138] sm:$0xff]
    %v72 = vld [vmem:[#allocation2 + $0x140] sm:$0xff]
    %v73 = vld [vmem:[#allocation2 + $0x148] sm:$0xff]
    %v74 = vld [vmem:[#allocation2 + $0x150] sm:$0xff]
    %v75 = vld [vmem:[#allocation2 + $0x158] sm:$0xff]
    %v76 = vld [vmem:[#allocation2 + $0x160] sm:$0xff]
    %v77 = vld [vmem:[#allocation2 + $0x168] sm:$0xff]
    %v78 = vld [vmem:[#allocation2 + $0x170] sm:$0xff]
    %v79 = vld [vmem:[#allocation2 + $0x178] sm:$0xff]
    %v80 = vld [vmem:[#allocation2 + $0x180] sm:$0xff]
    %v81 = vld [vmem:[#allocation2 + $0x188] sm:$0xff]
    %v82 = vld [vmem:[#allocation2 + $0x190] sm:$0xff]
    %v83 = vld [vmem:[#allocation2 + $0x198] sm:$0xff]
    %v84 = vld [vmem:[#allocation2 + $0x1a0] sm:$0xff]
    %v85 = vld [vmem:[#allocation2 + $0x1a8] sm:$0xff]
    %v86 = vld [vmem:[#allocation2 + $0x1b0] sm:$0xff]
    %v87 = vld [vmem:[#allocation2 + $0x1b8] sm:$0xff]
    %v88 = vld [vmem:[#allocation2 + $0x1c0] sm:$0xff]
    %v89 = vld [vmem:[#allocation2 + $0x1c8] sm:$0xff]
    %v90 = vld [vmem:[#allocation2 + $0x1d0] sm:$0xff]
    %v91 = vld [vmem:[#allocation2 + $0x1d8] sm:$0xff]
    %v92 = vld [vmem:[#allocation2 + $0x1e0] sm:$0xff]
    %v93 = vld [vmem:[#allocation2 + $0x1e8] sm:$0xff]
    %v94 = vld [vmem:[#allocation2 + $0x1f0] sm:$0xff]
    %v95 = vld [vmem:[#allocation2 + $0x1f8] sm:$0xff]
    %v96 = vld [vmem:[#allocation2 + $0x200] sm:$0xff]
    %v97 = vld [vmem:[#allocation2 + $0x208] sm:$0xff]
    %v98 = vld [vmem:[#allocation2 + $0x210] sm:$0xff]
    %v99 = vld [vmem:[#allocation2 + $0x218] sm:$0xff]
    %v100 = vld [vmem:[#allocation2 + $0x220] sm:$0xff]
    %v101 = vld [vmem:[#allocation2 + $0x228] sm:$0xff]
    %v102 = vld [vmem:[#allocation2 + $0x230] sm:$0xff]
    %v103 = vld [vmem:[#allocation2 + $0x238] sm:$0xff]
    %v104 = vld [vmem:[#allocation2 + $0x240] sm:$0xff]
    %v105 = vld [vmem:[#allocation2 + $0x248] sm:$0xff]
    %v106 = vld [vmem:[#allocation2 + $0x250] sm:$0xff]
    %v107 = vld [vmem:[#allocation2 + $0x258] sm:$0xff]
    %v108 = vld [vmem:[#allocation2 + $0x260] sm:$0xff]
    %v109 = vld [vmem:[#allocation2 + $0x268] sm:$0xff]
    %v110 = vld [vmem:[#allocation2 + $0x270] sm:$0xff]
    %v111 = vld [vmem:[#allocation2 + $0x278] sm:$0xff]
    %v112 = vld [vmem:[#allocation2 + $0x280] sm:$0xff]
    %v113 = vld [vmem:[#allocation2 + $0x288] sm:$0xff]
    %v114 = vld [vmem:[#allocation2 + $0x290] sm:$0xff]
    %v115 = vld [vmem:[#allocation2 + $0x298] sm:$0xff]
    %v116 = vld [vmem:[#allocation2 + $0x2a0] sm:$0xff]
    %v117 = vld [vmem:[#allocation2 + $0x2a8] sm:$0xff]
    %v118 = vld [vmem:[#allocation2 + $0x2b0] sm:$0xff]
    %v119 = vld [vmem:[#allocation2 + $0x2b8] sm:$0xff]
    %v120 = vld [vmem:[#allocation2 + $0x2c0] sm:$0xff]
    %v121 = vld [vmem:[#allocation2 + $0x2c8] sm:$0xff]
    %v122 = vld [vmem:[#allocation2 + $0x2d0] sm:$0xff]
    %v123 = vld [vmem:[#allocation2 + $0x2d8] sm:$0xff]
    %v124 = vld [vmem:[#allocation2 + $0x2e0] sm:$0xff]
    %v125 = vld [vmem:[#allocation2 + $0x2e8] sm:$0xff]
    %v126 = vld [vmem:[#allocation2 + $0x2f0] sm:$0xff]
    %v127 = vld [vmem:[#allocation2 + $0x2f8] sm:$0xff]
    %v128 = vld [vmem:[%s2] sm:$0x3f]
    %v129 = vld [vmem:[%s3] sm:$0x3f]
    %v130 = vld [vmem:[%s1] sm:$0xff]
    %v131 = vld [vmem:[%s1 + $0x8] sm:$0xff]
    %v132 = vld [vmem:[%s1 + $0x10] sm:$0xff]
    %v133 = vld [vmem:[%s1 + $0x18] sm:$0xff]
    %v134 = vld [vmem:[%s1 + $0x20] sm:$0xff]
    %v135 = vld [vmem:[%s1 + $0x28] sm:$0xff]
    %v136 = vld [vmem:[%s1 + $0x30] sm:$0xff]
    %v137 = vld [vmem:[%s1 + $0x38] sm:$0xff]
    %v138 = vld [vmem:[%s1 + $0x40] sm:$0xff]
    %v139 = vld [vmem:[%s1 + $0x48] sm:$0xff]
    %v140 = vld [vmem:[%s1 + $0x50] sm:$0xff]
    %v141 = vld [vmem:[%s1 + $0x58] sm:$0xff]
    %v142 = vld [vmem:[%s1 + $0x60] sm:$0xff]
    %v143 = vld [vmem:[%s1 + $0x68] sm:$0xff]
    %v144 = vld [vmem:[%s1 + $0x70] sm:$0xff]
    %v145 = vld [vmem:[%s1 + $0x78] sm:$0xff]
    %v146 = vadd.f32 %v32, 1.0
    %v147 = vadd.f32 %v33, 1.0
    %v148 = vadd.f32 %v34, 1.0
    %v149 = vadd.f32 %v35, 1.0
    %v150 = vadd.f32 %v36, 1.0
    %v151 = vadd.f32 %v37, 1.0
    %v152 = vadd.f32 %v38, 1.0
    %v153 = vadd.f32 %v39, 1.0
    %v154 = vadd.f32 %v40, 1.0
    %v155 = vadd.f32 %v41, 1.0
    %v156 = vadd.f32 %v42, 1.0
    %v157 = vadd.f32 %v43, 1.0
    %v158 = vadd.f32 %v44, 1.0
    %v159 = vadd.f32 %v45, 1.0
    %v160 = vadd.f32 %v46, 1.0
    %v161 = vadd.f32 %v47, 1.0
    %v162 = vadd.f32 %v48, 1.0
    %v163 = vadd.f32 %v49, 1.0
    %v164 = vadd.f32 %v50, 1.0
    %v165 = vadd.f32 %v51, 1.0
    %v166 = vadd.f32 %v52, 1.0
    %v167 = vadd.f32 %v53, 1.0
    %v168 = vadd.f32 %v54, 1.0
    %v169 = vadd.f32 %v55, 1.0
    %v170 = vadd.f32 %v56, 1.0
    %v171 = vadd.f32 %v57, 1.0
    %v172 = vadd.f32 %v58, 1.0
    %v173 = vadd.f32 %v59, 1.0
    %v174 = vadd.f32 %v60, 1.0
    %v175 = vadd.f32 %v61, 1.0
    %v176 = vadd.f32 %v62, 1.0
    %v177 = vadd.f32 %v63, 1.0
    %v178 = vadd.f32 %v64, 1.0
    %v179 = vadd.f32 %v65, 1.0
    %v180 = vadd.f32 %v66, 1.0
    %v181 = vadd.f32 %v67, 1.0
    %v182 = vadd.f32 %v68, 1.0
    %v183 = vadd.f32 %v69, 1.0
    %v184 = vadd.f32 %v70, 1.0
    %v185 = vadd.f32 %v71, 1.0
    %v186 = vadd.f32 %v72, 1.0
    %v187 = vadd.f32 %v73, 1.0
    %v188 = vadd.f32 %v74, 1.0
    %v189 = vadd.f32 %v75, 1.0
    %v190 = vadd.f32 %v76, 1.0
    %v191 = vadd.f32 %v77, 1.0
    %v192 = vadd.f32 %v78, 1.0
    %v193 = vadd.f32 %v79, 1.0
    %v194 = vadd.f32 %v80, 1.0
    %v195 = vadd.f32 %v81, 1.0
    %v196 = vadd.f32 %v82, 1.0
    %v197 = vadd.f32 %v83, 1.0
    %v198 = vadd.f32 %v84, 1.0
    %v199 = vadd.f32 %v85, 1.0
    %v200 = vadd.f32 %v86, 1.0
    %v201 = vadd.f32 %v87, 1.0
    %v202 = vadd.f32 %v88, 1.0
    %v203 = vadd.f32 %v89, 1.0
    %v204 = vadd.f32 %v90, 1.0
    %v205 = vadd.f32 %v91, 1.0
    %v206 = vadd.f32 %v92, 1.0
    %v207 = vadd.f32 %v93, 1.0
    %v208 = vadd.f32 %v94, 1.0
    %v209 = vadd.f32 %v95, 1.0
    %v210 = vadd.f32 %v96, 1.0
    %v211 = vadd.f32 %v97, 1.0
    %v212 = vadd.f32 %v98, 1.0
    %v213 = vadd.f32 %v99, 1.0
    %v214 = vadd.f32 %v100, 1.0
    %v215 = vadd.f32 %v101, 1.0
    %v216 = vadd.f32 %v102, 1.0
    %v217 = vadd.f32 %v103, 1.0
    %v218 = vadd.f32 %v104, 1.0
    %v219 = vadd.f32 %v105, 1.0
    %v220 = vadd.f32 %v106, 1.0
    %v221 = vadd.f32 %v107, 1.0
    %v222 = vadd.f32 %v108, 1.0
    %v223 = vadd.f32 %v109, 1.0
    %v224 = vadd.f32 %v110, 1.0
    %v225 = vadd.f32 %v111, 1.0
    %v226 = vadd.f32 %v112, 1.0
    %v227 = vadd.f32 %v113, 1.0
    %v228 = vadd.f32 %v114, 1.0
    %v229 = vadd.f32 %v115, 1.0
    %v230 = vadd.f32 %v116, 1.0
    %v231 = vadd.f32 %v117, 1.0
    %v232 = vadd.f32 %v118, 1.0
    %v233 = vadd.f32 %v119, 1.0
    %v234 = vadd.f32 %v120, 1.0
    %v235 = vadd.f32 %v121, 1.0
    %v236 = vadd.f32 %v122, 1.0
    %v237 = vadd.f32 %v123, 1.0
    %v238 = vadd.f32 %v124, 1.0
    %v239 = vadd.f32 %v125, 1.0
    %v240 = vadd.f32 %v126, 1.0
    %v241 = vadd.f32 %v127, 1.0
    %v242 = vmul.f32 %v146, 127.5
    %v243 = vmul.f32 %v147, 127.5
    %v244 = vmul.f32 %v148, 127.5
    %v245 = vmul.f32 %v149, 127.5
    %v246 = vmul.f32 %v150, 127.5
    %v247 = vmul.f32 %v151, 127.5
    %v248 = vmul.f32 %v152, 127.5
    %v249 = vmul.f32 %v153, 127.5
    %v250 = vmul.f32 %v154, 127.5
    %v251 = vmul.f32 %v155, 127.5
    %v252 = vmul.f32 %v156, 127.5
    %v253 = vmul.f32 %v157, 127.5
    %v254 = vmul.f32 %v158, 127.5
    %v255 = vmul.f32 %v159, 127.5
    %v256 = vmul.f32 %v160, 127.5
    %v257 = vmul.f32 %v161, 127.5
    %v258 = vmul.f32 %v162, 127.5
    %v259 = vmul.f32 %v163, 127.5
    %v260 = vmul.f32 %v164, 127.5
    %v261 = vmul.f32 %v165, 127.5
    %v262 = vmul.f32 %v166, 127.5
    %v263 = vmul.f32 %v167, 127.5
    %v264 = vmul.f32 %v168, 127.5
    %v265 = vmul.f32 %v169, 127.5
    %v266 = vmul.f32 %v170, 127.5
    %v267 = vmul.f32 %v171, 127.5
    %v268 = vmul.f32 %v172, 127.5
    %v269 = vmul.f32 %v173, 127.5
    %v270 = vmul.f32 %v174, 127.5
    %v271 = vmul.f32 %v175, 127.5
    %v272 = vmul.f32 %v176, 127.5
    %v273 = vmul.f32 %v177, 127.5
    %v274 = vmul.f32 %v178, 127.5
    %v275 = vmul.f32 %v179, 127.5
    %v276 = vmul.f32 %v180, 127.5
    %v277 = vmul.f32 %v181, 127.5
    %v278 = vmul.f32 %v182, 127.5
    %v279 = vmul.f32 %v183, 127.5
    %v280 = vmul.f32 %v184, 127.5
    %v281 = vmul.f32 %v185, 127.5
    %v282 = vmul.f32 %v186, 127.5
    %v283 = vmul.f32 %v187, 127.5
    %v284 = vmul.f32 %v188, 127.5
    %v285 = vmul.f32 %v189, 127.5
    %v286 = vmul.f32 %v190, 127.5
    %v287 = vmul.f32 %v191, 127.5
    %v288 = vmul.f32 %v192, 127.5
    %v289 = vmul.f32 %v193, 127.5
    %v290 = vmul.f32 %v194, 127.5
    %v291 = vmul.f32 %v195, 127.5
    %v292 = vmul.f32 %v196, 127.5
    %v293 = vmul.f32 %v197, 127.5
    %v294 = vmul.f32 %v198, 127.5
    %v295 = vmul.f32 %v199, 127.5
    %v296 = vmul.f32 %v200, 127.5
    %v297 = vmul.f32 %v201, 127.5
    %v298 = vmul.f32 %v202, 127.5
    %v299 = vmul.f32 %v203, 127.5
    %v300 = vmul.f32 %v204, 127.5
    %v301 = vmul.f32 %v205, 127.5
    %v302 = vmul.f32 %v206, 127.5
    %v303 = vmul.f32 %v207, 127.5
    %v304 = vmul.f32 %v208, 127.5
    %v305 = vmul.f32 %v209, 127.5
    %v306 = vmul.f32 %v210, 127.5
    %v307 = vmul.f32 %v211, 127.5
    %v308 = vmul.f32 %v212, 127.5
    %v309 = vmul.f32 %v213, 127.5
    %v310 = vmul.f32 %v214, 127.5
    %v311 = vmul.f32 %v215, 127.5
    %v312 = vmul.f32 %v216, 127.5
    %v313 = vmul.f32 %v217, 127.5
    %v314 = vmul.f32 %v218, 127.5
    %v315 = vmul.f32 %v219, 127.5
    %v316 = vmul.f32 %v220, 127.5
    %v317 = vmul.f32 %v221, 127.5
    %v318 = vmul.f32 %v222, 127.5
    %v319 = vmul.f32 %v223, 127.5
    %v320 = vmul.f32 %v224, 127.5
    %v321 = vmul.f32 %v225, 127.5
    %v322 = vmul.f32 %v226, 127.5
    %v323 = vmul.f32 %v227, 127.5
    %v324 = vmul.f32 %v228, 127.5
    %v325 = vmul.f32 %v229, 127.5
    %v326 = vmul.f32 %v230, 127.5
    %v327 = vmul.f32 %v231, 127.5
    %v328 = vmul.f32 %v232, 127.5
    %v329 = vmul.f32 %v233, 127.5
    %v330 = vmul.f32 %v234, 127.5
    %v331 = vmul.f32 %v235, 127.5
    %v332 = vmul.f32 %v236, 127.5
    %v333 = vmul.f32 %v237, 127.5
    %v334 = vmul.f32 %v238, 127.5
    %v335 = vmul.f32 %v239, 127.5
    %v336 = vmul.f32 %v240, 127.5
    %v337 = vmul.f32 %v241, 127.5
    %v338 = vmax.f32 %v242, 0.0
    %v339 = vmax.f32 %v243, 0.0
    %v340 = vmax.f32 %v244, 0.0
    %v341 = vmax.f32 %v245, 0.0
    %v342 = vmax.f32 %v246, 0.0
    %v343 = vmax.f32 %v247, 0.0
    %v344 = vmax.f32 %v248, 0.0
    %v345 = vmax.f32 %v249, 0.0
    %v346 = vmax.f32 %v250, 0.0
    %v347 = vmax.f32 %v251, 0.0
    %v348 = vmax.f32 %v252, 0.0
    %v349 = vmax.f32 %v253, 0.0
    %v350 = vmax.f32 %v254, 0.0
    %v351 = vmax.f32 %v255, 0.0
    %v352 = vmax.f32 %v256, 0.0
    %v353 = vmax.f32 %v257, 0.0
    %v354 = vmax.f32 %v258, 0.0
    %v355 = vmax.f32 %v259, 0.0
    %v356 = vmax.f32 %v260, 0.0
    %v357 = vmax.f32 %v261, 0.0
    %v358 = vmax.f32 %v262, 0.0
    %v359 = vmax.f32 %v263, 0.0
    %v360 = vmax.f32 %v264, 0.0
    %v361 = vmax.f32 %v265, 0.0
    %v362 = vmax.f32 %v266, 0.0
    %v363 = vmax.f32 %v267, 0.0
    %v364 = vmax.f32 %v268, 0.0
    %v365 = vmax.f32 %v269, 0.0
    %v366 = vmax.f32 %v270, 0.0
    %v367 = vmax.f32 %v271, 0.0
    %v368 = vmax.f32 %v272, 0.0
    %v369 = vmax.f32 %v273, 0.0
    %v370 = vmax.f32 %v274, 0.0
    %v371 = vmax.f32 %v275, 0.0
    %v372 = vmax.f32 %v276, 0.0
    %v373 = vmax.f32 %v277, 0.0
    %v374 = vmax.f32 %v278, 0.0
    %v375 = vmax.f32 %v279, 0.0
    %v376 = vmax.f32 %v280, 0.0
    %v377 = vmax.f32 %v281, 0.0
    %v378 = vmax.f32 %v282, 0.0
    %v379 = vmax.f32 %v283, 0.0
    %v380 = vmax.f32 %v284, 0.0
    %v381 = vmax.f32 %v285, 0.0
    %v382 = vmax.f32 %v286, 0.0
    %v383 = vmax.f32 %v287, 0.0
    %v384 = vmax.f32 %v288, 0.0
    %v385 = vmax.f32 %v289, 0.0
    %v386 = vmax.f32 %v290, 0.0
    %v387 = vmax.f32 %v291, 0.0
    %v388 = vmax.f32 %v292, 0.0
    %v389 = vmax.f32 %v293, 0.0
    %v390 = vmax.f32 %v294, 0.0
    %v391 = vmax.f32 %v295, 0.0
    %v392 = vmax.f32 %v296, 0.0
    %v393 = vmax.f32 %v297, 0.0
    %v394 = vmax.f32 %v298, 0.0
    %v395 = vmax.f32 %v299, 0.0
    %v396 = vmax.f32 %v300, 0.0
    %v397 = vmax.f32 %v301, 0.0
    %v398 = vmax.f32 %v302, 0.0
    %v399 = vmax.f32 %v303, 0.0
    %v400 = vmax.f32 %v304, 0.0
    %v401 = vmax.f32 %v305, 0.0
    %v402 = vmax.f32 %v306, 0.0
    %v403 = vmax.f32 %v307, 0.0
    %v404 = vmax.f32 %v308, 0.0
    %v405 = vmax.f32 %v309, 0.0
    %v406 = vmax.f32 %v310, 0.0
    %v407 = vmax.f32 %v311, 0.0
    %v408 = vmax.f32 %v312, 0.0
    %v409 = vmax.f32 %v313, 0.0
    %v410 = vmax.f32 %v314, 0.0
    %v411 = vmax.f32 %v315, 0.0
    %v412 = vmax.f32 %v316, 0.0
    %v413 = vmax.f32 %v317, 0.0
    %v414 = vmax.f32 %v318, 0.0
    %v415 = vmax.f32 %v319, 0.0
    %v416 = vmax.f32 %v320, 0.0
    %v417 = vmax.f32 %v321, 0.0
    %v418 = vmax.f32 %v322, 0.0
    %v419 = vmax.f32 %v323, 0.0
    %v420 = vmax.f32 %v324, 0.0
    %v421 = vmax.f32 %v325, 0.0
    %v422 = vmax.f32 %v326, 0.0
    %v423 = vmax.f32 %v327, 0.0
    %v424 = vmax.f32 %v328, 0.0
    %v425 = vmax.f32 %v329, 0.0
    %v426 = vmax.f32 %v330, 0.0
    %v427 = vmax.f32 %v331, 0.0
    %v428 = vmax.f32 %v332, 0.0
    %v429 = vmax.f32 %v333, 0.0
    %v430 = vmax.f32 %v334, 0.0
    %v431 = vmax.f32 %v335, 0.0
    %v432 = vmax.f32 %v336, 0.0
    %v433 = vmax.f32 %v337, 0.0
    %v434 = vmin.f32 %v338, 255.0
    %v435 = vmin.f32 %v339, 255.0
    %v436 = vmin.f32 %v340, 255.0
    %v437 = vmin.f32 %v341, 255.0
    %v438 = vmin.f32 %v342, 255.0
    %v439 = vmin.f32 %v343, 255.0
    %v440 = vmin.f32 %v344, 255.0
    %v441 = vmin.f32 %v345, 255.0
    %v442 = vmin.f32 %v346, 255.0
    %v443 = vmin.f32 %v347, 255.0
    %v444 = vmin.f32 %v348, 255.0
    %v445 = vmin.f32 %v349, 255.0
    %v446 = vmin.f32 %v350, 255.0
    %v447 = vmin.f32 %v351, 255.0
    %v448 = vmin.f32 %v352, 255.0
    %v449 = vmin.f32 %v353, 255.0
    %v450 = vmin.f32 %v354, 255.0
    %v451 = vmin.f32 %v355, 255.0
    %v452 = vmin.f32 %v356, 255.0
    %v453 = vmin.f32 %v357, 255.0
    %v454 = vmin.f32 %v358, 255.0
    %v455 = vmin.f32 %v359, 255.0
    %v456 = vmin.f32 %v360, 255.0
    %v457 = vmin.f32 %v361, 255.0
    %v458 = vmin.f32 %v362, 255.0
    %v459 = vmin.f32 %v363, 255.0
    %v460 = vmin.f32 %v364, 255.0
    %v461 = vmin.f32 %v365, 255.0
    %v462 = vmin.f32 %v366, 255.0
    %v463 = vmin.f32 %v367, 255.0
    %v464 = vmin.f32 %v368, 255.0
    %v465 = vmin.f32 %v369, 255.0
    %v466 = vmin.f32 %v370, 255.0
    %v467 = vmin.f32 %v371, 255.0
    %v468 = vmin.f32 %v372, 255.0
    %v469 = vmin.f32 %v373, 255.0
    %v470 = vmin.f32 %v374, 255.0
    %v471 = vmin.f32 %v375, 255.0
    %v472 = vmin.f32 %v376, 255.0
    %v473 = vmin.f32 %v377, 255.0
    %v474 = vmin.f32 %v378, 255.0
    %v475 = vmin.f32 %v379, 255.0
    %v476 = vmin.f32 %v380, 255.0
    %v477 = vmin.f32 %v381, 255.0
    %v478 = vmin.f32 %v382, 255.0
    %v479 = vmin.f32 %v383, 255.0
    %v480 = vmin.f32 %v384, 255.0
    %v481 = vmin.f32 %v385, 255.0
    %v482 = vmin.f32 %v386, 255.0
    %v483 = vmin.f32 %v387, 255.0
    %v484 = vmin.f32 %v388, 255.0
    %v485 = vmin.f32 %v389, 255.0
    %v486 = vmin.f32 %v390, 255.0
    %v487 = vmin.f32 %v391, 255.0
    %v488 = vmin.f32 %v392, 255.0
    %v489 = vmin.f32 %v393, 255.0
    %v490 = vmin.f32 %v394, 255.0
    %v491 = vmin.f32 %v395, 255.0
    %v492 = vmin.f32 %v396, 255.0
    %v493 = vmin.f32 %v397, 255.0
    %v494 = vmin.f32 %v398, 255.0
    %v495 = vmin.f32 %v399, 255.0
    %v496 = vmin.f32 %v400, 255.0
    %v497 = vmin.f32 %v401, 255.0
    %v498 = vmin.f32 %v402, 255.0
    %v499 = vmin.f32 %v403, 255.0
    %v500 = vmin.f32 %v404, 255.0
    %v501 = vmin.f32 %v405, 255.0
    %v502 = vmin.f32 %v406, 255.0
    %v503 = vmin.f32 %v407, 255.0
    %v504 = vmin.f32 %v408, 255.0
    %v505 = vmin.f32 %v409, 255.0
    %v506 = vmin.f32 %v410, 255.0
    %v507 = vmin.f32 %v411, 255.0
    %v508 = vmin.f32 %v412, 255.0
    %v509 = vmin.f32 %v413, 255.0
    %v510 = vmin.f32 %v414, 255.0
    %v511 = vmin.f32 %v415, 255.0
    %v512 = vmin.f32 %v416, 255.0
    %v513 = vmin.f32 %v417, 255.0
    %v514 = vmin.f32 %v418, 255.0
    %v515 = vmin.f32 %v419, 255.0
    %v516 = vmin.f32 %v420, 255.0
    %v517 = vmin.f32 %v421, 255.0
    %v518 = vmin.f32 %v422, 255.0
    %v519 = vmin.f32 %v423, 255.0
    %v520 = vmin.f32 %v424, 255.0
    %v521 = vmin.f32 %v425, 255.0
    %v522 = vmin.f32 %v426, 255.0
    %v523 = vmin.f32 %v427, 255.0
    %v524 = vmin.f32 %v428, 255.0
    %v525 = vmin.f32 %v429, 255.0
    %v526 = vmin.f32 %v430, 255.0
    %v527 = vmin.f32 %v431, 255.0
    %v528 = vmin.f32 %v432, 255.0
    %v529 = vmin.f32 %v433, 255.0
    %v531 = vlaneseq
    %v532 = vshrl.u32 %v531, 7
    %v533 = vsub.s32 0, %v532
    %v534 = vrot.slane %v128, %v533
    %v535 = vlaneseq
    %v536 = vshrl.u32 %v535, 7
    %v537 = vsub.s32 1, %v536
    %v538 = vrot.slane %v128, %v537
    %v539 = vlaneseq
    %v540 = vshrl.u32 %v539, 7
    %v541 = vsub.s32 2, %v540
    %v542 = vrot.slane %v128, %v541
    %v543 = vlaneseq
    %v544 = vshrl.u32 %v543, 7
    %v545 = vsub.s32 3, %v544
    %v546 = vrot.slane %v128, %v545
    %v547 = vlaneseq
    %v548 = vshrl.u32 %v547, 7
    %v549 = vsub.s32 4, %v548
    %v550 = vrot.slane %v128, %v549
    %v551 = vlaneseq
    %v552 = vshrl.u32 %v551, 7
    %v553 = vsub.s32 5, %v552
    %v554 = vrot.slane %v128, %v553
    %v561 = vmul.f32 %v434, %v534
    %v562 = vmul.f32 %v435, %v538
    %v563 = vmul.f32 %v436, %v542
    %v564 = vmul.f32 %v437, %v546
    %v565 = vmul.f32 %v438, %v550
    %v566 = vmul.f32 %v439, %v554
    %v567 = vmul.f32 %v440, %v534
    %v568 = vmul.f32 %v441, %v538
    %v569 = vmul.f32 %v442, %v542
    %v570 = vmul.f32 %v443, %v546
    %v571 = vmul.f32 %v444, %v550
    %v572 = vmul.f32 %v445, %v554
    %v573 = vmul.f32 %v446, %v534
    %v574 = vmul.f32 %v447, %v538
    %v575 = vmul.f32 %v448, %v542
    %v576 = vmul.f32 %v449, %v546
    %v577 = vmul.f32 %v450, %v550
    %v578 = vmul.f32 %v451, %v554
    %v579 = vmul.f32 %v452, %v534
    %v580 = vmul.f32 %v453, %v538
    %v581 = vmul.f32 %v454, %v542
    %v582 = vmul.f32 %v455, %v546
    %v583 = vmul.f32 %v456, %v550
    %v584 = vmul.f32 %v457, %v554
    %v585 = vmul.f32 %v458, %v534
    %v586 = vmul.f32 %v459, %v538
    %v587 = vmul.f32 %v460, %v542
    %v588 = vmul.f32 %v461, %v546
    %v589 = vmul.f32 %v462, %v550
    %v590 = vmul.f32 %v463, %v554
    %v591 = vmul.f32 %v464, %v534
    %v592 = vmul.f32 %v465, %v538
    %v593 = vmul.f32 %v466, %v542
    %v594 = vmul.f32 %v467, %v546
    %v595 = vmul.f32 %v468, %v550
    %v596 = vmul.f32 %v469, %v554
    %v597 = vmul.f32 %v470, %v534
    %v598 = vmul.f32 %v471, %v538
    %v599 = vmul.f32 %v472, %v542
    %v600 = vmul.f32 %v473, %v546
    %v601 = vmul.f32 %v474, %v550
    %v602 = vmul.f32 %v475, %v554
    %v603 = vmul.f32 %v476, %v534
    %v604 = vmul.f32 %v477, %v538
    %v605 = vmul.f32 %v478, %v542
    %v606 = vmul.f32 %v479, %v546
    %v607 = vmul.f32 %v480, %v550
    %v608 = vmul.f32 %v481, %v554
    %v609 = vmul.f32 %v482, %v534
    %v610 = vmul.f32 %v483, %v538
    %v611 = vmul.f32 %v484, %v542
    %v612 = vmul.f32 %v485, %v546
    %v613 = vmul.f32 %v486, %v550
    %v614 = vmul.f32 %v487, %v554
    %v615 = vmul.f32 %v488, %v534
    %v616 = vmul.f32 %v489, %v538
    %v617 = vmul.f32 %v490, %v542
    %v618 = vmul.f32 %v491, %v546
    %v619 = vmul.f32 %v492, %v550
    %v620 = vmul.f32 %v493, %v554
    %v621 = vmul.f32 %v494, %v534
    %v622 = vmul.f32 %v495, %v538
    %v623 = vmul.f32 %v496, %v542
    %v624 = vmul.f32 %v497, %v546
    %v625 = vmul.f32 %v498, %v550
    %v626 = vmul.f32 %v499, %v554
    %v627 = vmul.f32 %v500, %v534
    %v628 = vmul.f32 %v501, %v538
    %v629 = vmul.f32 %v502, %v542
    %v630 = vmul.f32 %v503, %v546
    %v631 = vmul.f32 %v504, %v550
    %v632 = vmul.f32 %v505, %v554
    %v633 = vmul.f32 %v506, %v534
    %v634 = vmul.f32 %v507, %v538
    %v635 = vmul.f32 %v508, %v542
    %v636 = vmul.f32 %v509, %v546
    %v637 = vmul.f32 %v510, %v550
    %v638 = vmul.f32 %v511, %v554
    %v639 = vmul.f32 %v512, %v534
    %v640 = vmul.f32 %v513, %v538
    %v641 = vmul.f32 %v514, %v542
    %v642 = vmul.f32 %v515, %v546
    %v643 = vmul.f32 %v516, %v550
    %v644 = vmul.f32 %v517, %v554
    %v645 = vmul.f32 %v518, %v534
    %v646 = vmul.f32 %v519, %v538
    %v647 = vmul.f32 %v520, %v542
    %v648 = vmul.f32 %v521, %v546
    %v649 = vmul.f32 %v522, %v550
    %v650 = vmul.f32 %v523, %v554
    %v651 = vmul.f32 %v524, %v534
    %v652 = vmul.f32 %v525, %v538
    %v653 = vmul.f32 %v526, %v542
    %v654 = vmul.f32 %v527, %v546
    %v655 = vmul.f32 %v528, %v550
    %v656 = vmul.f32 %v529, %v554
    %v658 = vlaneseq
    %v659 = vshrl.u32 %v658, 7
    %v660 = vsub.s32 0, %v659
    %v661 = vrot.slane %v129, %v660
    %v662 = vlaneseq
    %v663 = vshrl.u32 %v662, 7
    %v664 = vsub.s32 1, %v663
    %v665 = vrot.slane %v129, %v664
    %v666 = vlaneseq
    %v667 = vshrl.u32 %v666, 7
    %v668 = vsub.s32 2, %v667
    %v669 = vrot.slane %v129, %v668
    %v670 = vlaneseq
    %v671 = vshrl.u32 %v670, 7
    %v672 = vsub.s32 3, %v671
    %v673 = vrot.slane %v129, %v672
    %v674 = vlaneseq
    %v675 = vshrl.u32 %v674, 7
    %v676 = vsub.s32 4, %v675
    %v677 = vrot.slane %v129, %v676
    %v678 = vlaneseq
    %v679 = vshrl.u32 %v678, 7
    %v680 = vsub.s32 5, %v679
    %v681 = vrot.slane %v129, %v680
    %v688 = vsub.f32 %v561, %v661
    %v689 = vsub.f32 %v562, %v665
    %v690 = vsub.f32 %v563, %v669
    %v691 = vsub.f32 %v564, %v673
    %v692 = vsub.f32 %v565, %v677
    %v693 = vsub.f32 %v566, %v681
    %v694 = vsub.f32 %v567, %v661
    %v695 = vsub.f32 %v568, %v665
    %v696 = vsub.f32 %v569, %v669
    %v697 = vsub.f32 %v570, %v673
    %v698 = vsub.f32 %v571, %v677
    %v699 = vsub.f32 %v572, %v681
    %v700 = vsub.f32 %v573, %v661
    %v701 = vsub.f32 %v574, %v665
    %v702 = vsub.f32 %v575, %v669
    %v703 = vsub.f32 %v576, %v673
    %v704 = vsub.f32 %v577, %v677
    %v705 = vsub.f32 %v578, %v681
    %v706 = vsub.f32 %v579, %v661
    %v707 = vsub.f32 %v580, %v665
    %v708 = vsub.f32 %v581, %v669
    %v709 = vsub.f32 %v582, %v673
    %v710 = vsub.f32 %v583, %v677
    %v711 = vsub.f32 %v584, %v681
    %v712 = vsub.f32 %v585, %v661
    %v713 = vsub.f32 %v586, %v665
    %v714 = vsub.f32 %v587, %v669
    %v715 = vsub.f32 %v588, %v673
    %v716 = vsub.f32 %v589, %v677
    %v717 = vsub.f32 %v590, %v681
    %v718 = vsub.f32 %v591, %v661
    %v719 = vsub.f32 %v592, %v665
    %v720 = vsub.f32 %v593, %v669
    %v721 = vsub.f32 %v594, %v673
    %v722 = vsub.f32 %v595, %v677
    %v723 = vsub.f32 %v596, %v681
    %v724 = vsub.f32 %v597, %v661
    %v725 = vsub.f32 %v598, %v665
    %v726 = vsub.f32 %v599, %v669
    %v727 = vsub.f32 %v600, %v673
    %v728 = vsub.f32 %v601, %v677
    %v729 = vsub.f32 %v602, %v681
    %v730 = vsub.f32 %v603, %v661
    %v731 = vsub.f32 %v604, %v665
    %v732 = vsub.f32 %v605, %v669
    %v733 = vsub.f32 %v606, %v673
    %v734 = vsub.f32 %v607, %v677
    %v735 = vsub.f32 %v608, %v681
    %v736 = vsub.f32 %v609, %v661
    %v737 = vsub.f32 %v610, %v665
    %v738 = vsub.f32 %v611, %v669
    %v739 = vsub.f32 %v612, %v673
    %v740 = vsub.f32 %v613, %v677
    %v741 = vsub.f32 %v614, %v681
    %v742 = vsub.f32 %v615, %v661
    %v743 = vsub.f32 %v616, %v665
    %v744 = vsub.f32 %v617, %v669
    %v745 = vsub.f32 %v618, %v673
    %v746 = vsub.f32 %v619, %v677
    %v747 = vsub.f32 %v620, %v681
    %v748 = vsub.f32 %v621, %v661
    %v749 = vsub.f32 %v622, %v665
    %v750 = vsub.f32 %v623, %v669
    %v751 = vsub.f32 %v624, %v673
    %v752 = vsub.f32 %v625, %v677
    %v753 = vsub.f32 %v626, %v681
    %v754 = vsub.f32 %v627, %v661
    %v755 = vsub.f32 %v628, %v665
    %v756 = vsub.f32 %v629, %v669
    %v757 = vsub.f32 %v630, %v673
    %v758 = vsub.f32 %v631, %v677
    %v759 = vsub.f32 %v632, %v681
    %v760 = vsub.f32 %v633, %v661
    %v761 = vsub.f32 %v634, %v665
    %v762 = vsub.f32 %v635, %v669
    %v763 = vsub.f32 %v636, %v673
    %v764 = vsub.f32 %v637, %v677
    %v765 = vsub.f32 %v638, %v681
    %v766 = vsub.f32 %v639, %v661
    %v767 = vsub.f32 %v640, %v665
    %v768 = vsub.f32 %v641, %v669
    %v769 = vsub.f32 %v642, %v673
    %v770 = vsub.f32 %v643, %v677
    %v771 = vsub.f32 %v644, %v681
    %v772 = vsub.f32 %v645, %v661
    %v773 = vsub.f32 %v646, %v665
    %v774 = vsub.f32 %v647, %v669
    %v775 = vsub.f32 %v648, %v673
    %v776 = vsub.f32 %v649, %v677
    %v777 = vsub.f32 %v650, %v681
    %v778 = vsub.f32 %v651, %v661
    %v779 = vsub.f32 %v652, %v665
    %v780 = vsub.f32 %v653, %v669
    %v781 = vsub.f32 %v654, %v673
    %v782 = vsub.f32 %v655, %v677
    %v783 = vsub.f32 %v656, %v681
    %785 = vset.pattern.permute.xlu0 0
    %786 = vperm.xlu0 %785, %v130
    %v787 = vpop.permute.xlu0 %786
    %790 = vset.pattern.permute.xlu0 0
    %791 = vperm.xlu0 %790, %v131
    %v792 = vpop.permute.xlu0 %791
    %795 = vset.pattern.permute.xlu0 0
    %796 = vperm.xlu0 %795, %v132
    %v797 = vpop.permute.xlu0 %796
    %800 = vset.pattern.permute.xlu0 0
    %801 = vperm.xlu0 %800, %v133
    %v802 = vpop.permute.xlu0 %801
    %805 = vset.pattern.permute.xlu0 0
    %806 = vperm.xlu0 %805, %v134
    %v807 = vpop.permute.xlu0 %806
    %810 = vset.pattern.permute.xlu0 0
    %811 = vperm.xlu0 %810, %v135
    %v812 = vpop.permute.xlu0 %811
    %815 = vset.pattern.permute.xlu0 0
    %816 = vperm.xlu0 %815, %v136
    %v817 = vpop.permute.xlu0 %816
    %820 = vset.pattern.permute.xlu0 0
    %821 = vperm.xlu0 %820, %v137
    %v822 = vpop.permute.xlu0 %821
    %825 = vset.pattern.permute.xlu0 0
    %826 = vperm.xlu0 %825, %v138
    %v827 = vpop.permute.xlu0 %826
    %830 = vset.pattern.permute.xlu0 0
    %831 = vperm.xlu0 %830, %v139
    %v832 = vpop.permute.xlu0 %831
    %835 = vset.pattern.permute.xlu0 0
    %836 = vperm.xlu0 %835, %v140
    %v837 = vpop.permute.xlu0 %836
    %840 = vset.pattern.permute.xlu0 0
    %841 = vperm.xlu0 %840, %v141
    %v842 = vpop.permute.xlu0 %841
    %845 = vset.pattern.permute.xlu0 0
    %846 = vperm.xlu0 %845, %v142
    %v847 = vpop.permute.xlu0 %846
    %850 = vset.pattern.permute.xlu0 0
    %851 = vperm.xlu0 %850, %v143
    %v852 = vpop.permute.xlu0 %851
    %855 = vset.pattern.permute.xlu0 0
    %856 = vperm.xlu0 %855, %v144
    %v857 = vpop.permute.xlu0 %856
    %860 = vset.pattern.permute.xlu0 0
    %861 = vperm.xlu0 %860, %v145
    %v862 = vpop.permute.xlu0 %861
    %v864 = vmul.f32 %v688, %v787
    %v865 = vmul.f32 %v689, %v787
    %v866 = vmul.f32 %v690, %v787
    %v867 = vmul.f32 %v691, %v787
    %v868 = vmul.f32 %v692, %v787
    %v869 = vmul.f32 %v693, %v787
    %v870 = vmul.f32 %v694, %v792
    %v871 = vmul.f32 %v695, %v792
    %v872 = vmul.f32 %v696, %v792
    %v873 = vmul.f32 %v697, %v792
    %v874 = vmul.f32 %v698, %v792
    %v875 = vmul.f32 %v699, %v792
    %v876 = vmul.f32 %v700, %v797
    %v877 = vmul.f32 %v701, %v797
    %v878 = vmul.f32 %v702, %v797
    %v879 = vmul.f32 %v703, %v797
    %v880 = vmul.f32 %v704, %v797
    %v881 = vmul.f32 %v705, %v797
    %v882 = vmul.f32 %v706, %v802
    %v883 = vmul.f32 %v707, %v802
    %v884 = vmul.f32 %v708, %v802
    %v885 = vmul.f32 %v709, %v802
    %v886 = vmul.f32 %v710, %v802
    %v887 = vmul.f32 %v711, %v802
    %v888 = vmul.f32 %v712, %v807
    %v889 = vmul.f32 %v713, %v807
    %v890 = vmul.f32 %v714, %v807
    %v891 = vmul.f32 %v715, %v807
    %v892 = vmul.f32 %v716, %v807
    %v893 = vmul.f32 %v717, %v807
    %v894 = vmul.f32 %v718, %v812
    %v895 = vmul.f32 %v719, %v812
    %v896 = vmul.f32 %v720, %v812
    %v897 = vmul.f32 %v721, %v812
    %v898 = vmul.f32 %v722, %v812
    %v899 = vmul.f32 %v723, %v812
    %v900 = vmul.f32 %v724, %v817
    %v901 = vmul.f32 %v725, %v817
    %v902 = vmul.f32 %v726, %v817
    %v903 = vmul.f32 %v727, %v817
    %v904 = vmul.f32 %v728, %v817
    %v905 = vmul.f32 %v729, %v817
    %v906 = vmul.f32 %v730, %v822
    %v907 = vmul.f32 %v731, %v822
    %v908 = vmul.f32 %v732, %v822
    %v909 = vmul.f32 %v733, %v822
    %v910 = vmul.f32 %v734, %v822
    %v911 = vmul.f32 %v735, %v822
    %v912 = vmul.f32 %v736, %v827
    %v913 = vmul.f32 %v737, %v827
    %v914 = vmul.f32 %v738, %v827
    %v915 = vmul.f32 %v739, %v827
    %v916 = vmul.f32 %v740, %v827
    %v917 = vmul.f32 %v741, %v827
    %v918 = vmul.f32 %v742, %v832
    %v919 = vmul.f32 %v743, %v832
    %v920 = vmul.f32 %v744, %v832
    %v921 = vmul.f32 %v745, %v832
    %v922 = vmul.f32 %v746, %v832
    %v923 = vmul.f32 %v747, %v832
    %v924 = vmul.f32 %v748, %v837
    %v925 = vmul.f32 %v749, %v837
    %v926 = vmul.f32 %v750, %v837
    %v927 = vmul.f32 %v751, %v837
    %v928 = vmul.f32 %v752, %v837
    %v929 = vmul.f32 %v753, %v837
    %v930 = vmul.f32 %v754, %v842
    %v931 = vmul.f32 %v755, %v842
    %v932 = vmul.f32 %v756, %v842
    %v933 = vmul.f32 %v757, %v842
    %v934 = vmul.f32 %v758, %v842
    %v935 = vmul.f32 %v759, %v842
    %v936 = vmul.f32 %v760, %v847
    %v937 = vmul.f32 %v761, %v847
    %v938 = vmul.f32 %v762, %v847
    %v939 = vmul.f32 %v763, %v847
    %v940 = vmul.f32 %v764, %v847
    %v941 = vmul.f32 %v765, %v847
    %v942 = vmul.f32 %v766, %v852
    %v943 = vmul.f32 %v767, %v852
    %v944 = vmul.f32 %v768, %v852
    %v945 = vmul.f32 %v769, %v852
    %v946 = vmul.f32 %v770, %v852
    %v947 = vmul.f32 %v771, %v852
    %v948 = vmul.f32 %v772, %v857
    %v949 = vmul.f32 %v773, %v857
    %v950 = vmul.f32 %v774, %v857
    %v951 = vmul.f32 %v775, %v857
    %v952 = vmul.f32 %v776, %v857
    %v953 = vmul.f32 %v777, %v857
    %v954 = vmul.f32 %v778, %v862
    %v955 = vmul.f32 %v779, %v862
    %v956 = vmul.f32 %v780, %v862
    %v957 = vmul.f32 %v781, %v862
    %v958 = vmul.f32 %v782, %v862
    %v959 = vmul.f32 %v783, %v862
    %960 = vst [vmem:[#allocation5] sm:$0xff] %v864
    %961 = vst [vmem:[#allocation5 + $0x8] sm:$0xff] %v865
    %962 = vst [vmem:[#allocation5 + $0x10] sm:$0xff] %v866
    %963 = vst [vmem:[#allocation5 + $0x18] sm:$0xff] %v867
    %964 = vst [vmem:[#allocation5 + $0x20] sm:$0xff] %v868
    %965 = vst [vmem:[#allocation5 + $0x28] sm:$0xff] %v869
    %966 = vst [vmem:[#allocation5 + $0x30] sm:$0xff] %v870
    %967 = vst [vmem:[#allocation5 + $0x38] sm:$0xff] %v871
    %968 = vst [vmem:[#allocation5 + $0x40] sm:$0xff] %v872
    %969 = vst [vmem:[#allocation5 + $0x48] sm:$0xff] %v873
    %970 = vst [vmem:[#allocation5 + $0x50] sm:$0xff] %v874
    %971 = vst [vmem:[#allocation5 + $0x58] sm:$0xff] %v875
    %972 = vst [vmem:[#allocation5 + $0x60] sm:$0xff] %v876
    %973 = vst [vmem:[#allocation5 + $0x68] sm:$0xff] %v877
    %974 = vst [vmem:[#allocation5 + $0x70] sm:$0xff] %v878
    %975 = vst [vmem:[#allocation5 + $0x78] sm:$0xff] %v879
    %976 = vst [vmem:[#allocation5 + $0x80] sm:$0xff] %v880
    %977 = vst [vmem:[#allocation5 + $0x88] sm:$0xff] %v881
    %978 = vst [vmem:[#allocation5 + $0x90] sm:$0xff] %v882
    %979 = vst [vmem:[#allocation5 + $0x98] sm:$0xff] %v883
    %980 = vst [vmem:[#allocation5 + $0xa0] sm:$0xff] %v884
    %981 = vst [vmem:[#allocation5 + $0xa8] sm:$0xff] %v885
    %982 = vst [vmem:[#allocation5 + $0xb0] sm:$0xff] %v886
    %983 = vst [vmem:[#allocation5 + $0xb8] sm:$0xff] %v887
    %984 = vst [vmem:[#allocation5 + $0xc0] sm:$0xff] %v888
    %985 = vst [vmem:[#allocation5 + $0xc8] sm:$0xff] %v889
    %986 = vst [vmem:[#allocation5 + $0xd0] sm:$0xff] %v890
    %987 = vst [vmem:[#allocation5 + $0xd8] sm:$0xff] %v891
    %988 = vst [vmem:[#allocation5 + $0xe0] sm:$0xff] %v892
    %989 = vst [vmem:[#allocation5 + $0xe8] sm:$0xff] %v893
    %990 = vst [vmem:[#allocation5 + $0xf0] sm:$0xff] %v894
    %991 = vst [vmem:[#allocation5 + $0xf8] sm:$0xff] %v895
    %992 = vst [vmem:[#allocation5 + $0x100] sm:$0xff] %v896
    %993 = vst [vmem:[#allocation5 + $0x108] sm:$0xff] %v897
    %994 = vst [vmem:[#allocation5 + $0x110] sm:$0xff] %v898
    %995 = vst [vmem:[#allocation5 + $0x118] sm:$0xff] %v899
    %996 = vst [vmem:[#allocation5 + $0x120] sm:$0xff] %v900
    %997 = vst [vmem:[#allocation5 + $0x128] sm:$0xff] %v901
    %998 = vst [vmem:[#allocation5 + $0x130] sm:$0xff] %v902
    %999 = vst [vmem:[#allocation5 + $0x138] sm:$0xff] %v903
    %1000 = vst [vmem:[#allocation5 + $0x140] sm:$0xff] %v904
    %1001 = vst [vmem:[#allocation5 + $0x148] sm:$0xff] %v905
    %1002 = vst [vmem:[#allocation5 + $0x150] sm:$0xff] %v906
    %1003 = vst [vmem:[#allocation5 + $0x158] sm:$0xff] %v907
    %1004 = vst [vmem:[#allocation5 + $0x160] sm:$0xff] %v908
    %1005 = vst [vmem:[#allocation5 + $0x168] sm:$0xff] %v909
    %1006 = vst [vmem:[#allocation5 + $0x170] sm:$0xff] %v910
    %1007 = vst [vmem:[#allocation5 + $0x178] sm:$0xff] %v911
    %1008 = vst [vmem:[#allocation5 + $0x180] sm:$0xff] %v912
    %1009 = vst [vmem:[#allocation5 + $0x188] sm:$0xff] %v913
    %1010 = vst [vmem:[#allocation5 + $0x190] sm:$0xff] %v914
    %1011 = vst [vmem:[#allocation5 + $0x198] sm:$0xff] %v915
    %1012 = vst [vmem:[#allocation5 + $0x1a0] sm:$0xff] %v916
    %1013 = vst [vmem:[#allocation5 + $0x1a8] sm:$0xff] %v917
    %1014 = vst [vmem:[#allocation5 + $0x1b0] sm:$0xff] %v918
    %1015 = vst [vmem:[#allocation5 + $0x1b8] sm:$0xff] %v919
    %1016 = vst [vmem:[#allocation5 + $0x1c0] sm:$0xff] %v920
    %1017 = vst [vmem:[#allocation5 + $0x1c8] sm:$0xff] %v921
    %1018 = vst [vmem:[#allocation5 + $0x1d0] sm:$0xff] %v922
    %1019 = vst [vmem:[#allocation5 + $0x1d8] sm:$0xff] %v923
    %1020 = vst [vmem:[#allocation5 + $0x1e0] sm:$0xff] %v924
    %1021 = vst [vmem:[#allocation5 + $0x1e8] sm:$0xff] %v925
    %1022 = vst [vmem:[#allocation5 + $0x1f0] sm:$0xff] %v926
    %1023 = vst [vmem:[#allocation5 + $0x1f8] sm:$0xff] %v927
    %1024 = vst [vmem:[#allocation5 + $0x200] sm:$0xff] %v928
    %1025 = vst [vmem:[#allocation5 + $0x208] sm:$0xff] %v929
    %1026 = vst [vmem:[#allocation5 + $0x210] sm:$0xff] %v930
    %1027 = vst [vmem:[#allocation5 + $0x218] sm:$0xff] %v931
    %1028 = vst [vmem:[#allocation5 + $0x220] sm:$0xff] %v932
    %1029 = vst [vmem:[#allocation5 + $0x228] sm:$0xff] %v933
    %1030 = vst [vmem:[#allocation5 + $0x230] sm:$0xff] %v934
    %1031 = vst [vmem:[#allocation5 + $0x238] sm:$0xff] %v935
    %1032 = vst [vmem:[#allocation5 + $0x240] sm:$0xff] %v936
    %1033 = vst [vmem:[#allocation5 + $0x248] sm:$0xff] %v937
    %1034 = vst [vmem:[#allocation5 + $0x250] sm:$0xff] %v938
    %1035 = vst [vmem:[#allocation5 + $0x258] sm:$0xff] %v939
    %1036 = vst [vmem:[#allocation5 + $0x260] sm:$0xff] %v940
    %1037 = vst [vmem:[#allocation5 + $0x268] sm:$0xff] %v941
    %1038 = vst [vmem:[#allocation5 + $0x270] sm:$0xff] %v942
    %1039 = vst [vmem:[#allocation5 + $0x278] sm:$0xff] %v943
    %1040 = vst [vmem:[#allocation5 + $0x280] sm:$0xff] %v944
    %1041 = vst [vmem:[#allocation5 + $0x288] sm:$0xff] %v945
    %1042 = vst [vmem:[#allocation5 + $0x290] sm:$0xff] %v946
    %1043 = vst [vmem:[#allocation5 + $0x298] sm:$0xff] %v947
    %1044 = vst [vmem:[#allocation5 + $0x2a0] sm:$0xff] %v948
    %1045 = vst [vmem:[#allocation5 + $0x2a8] sm:$0xff] %v949
    %1046 = vst [vmem:[#allocation5 + $0x2b0] sm:$0xff] %v950
    %1047 = vst [vmem:[#allocation5 + $0x2b8] sm:$0xff] %v951
    %1048 = vst [vmem:[#allocation5 + $0x2c0] sm:$0xff] %v952
    %1049 = vst [vmem:[#allocation5 + $0x2c8] sm:$0xff] %v953
    %1050 = vst [vmem:[#allocation5 + $0x2d0] sm:$0xff] %v954
    %1051 = vst [vmem:[#allocation5 + $0x2d8] sm:$0xff] %v955
    %1052 = vst [vmem:[#allocation5 + $0x2e0] sm:$0xff] %v956
    %1053 = vst [vmem:[#allocation5 + $0x2e8] sm:$0xff] %v957
    %1054 = vst [vmem:[#allocation5 + $0x2f0] sm:$0xff] %v958
    %1055 = vst [vmem:[#allocation5 + $0x2f8] sm:$0xff] %v959
    // Predicated region
    $region22: #{tpu_custom_call.1} parent=1 // pred_check
      _
    $region23: #{tpu_custom_call.1} parent=1 // pred_check_branch
      %1057 = sbr.rel (0) target = $region25
    $region24: #{tpu_custom_call.1} parent=1 // pred_region
      %s1059 = ssub.s32 12288, 12288
      %1060 = vsyncadd [#allocation4], %s1059
      %s1061 = sshll.u32 [#allocation5], 4
      %s1062 = int_to_ptr.vmem [resolvable:$true] %s1061
      %1067 = dma.vmem_to_hbm [thread:$0]  %s1062, 12288, %s4, [#allocation4], 768, 768, 48
    $region25: #{tpu_custom_call.1} parent=1 // pred_fallthru
      _
    // Predicated region
    $region26: #{tpu_custom_call.1} parent=1 // pred_check
      _
    $region27: #{tpu_custom_call.1} parent=1 // pred_check_branch
      %1069 = sbr.rel (0) target = $region29
    $region28: #{tpu_custom_call.1} parent=1 // pred_region
      %1070 = dma.done [#allocation4], 12288
    $region29: #{tpu_custom_call.1} parent=1 // pred_fallthru
      _
    %1071 = vsyncpa [#allocation3], 1
    %1072 = vsyncpa [#allocation4], 1

</llo_original>
